<compile_context>
chip_gen: v5e
topology: v5e:2x2
jax: 0.10.0
libtpu: 0.0.40
codegen_flags: <defaults>
</compile_context>

<pallas_src>
import jax
import jax.numpy as jnp
from jax.experimental import pallas as pl
from jax.experimental.pallas import tpu as pltpu

# ----------------------- model hyper-parameters (small) ---------------------
B        = 2          # batch
WINDOW   = 8          # window
N_MULTIV = 4          # n_multiv
D_MODEL  = 32         # d_model
N_LAYERS = 3          # n_layers (identity stacks, see TODO above)

# packed-parameter row layout inside the single (8, 128) f32 parameter array
_ROW_W2   = 0          # linear2 weight (transposed)  -> cols 0..D_MODEL-1
_ROW_B2   = 1          # linear2 bias                 -> cols 0..D_MODEL-1
_ROW_WFC  = 2          # fc1 weight                   -> cols 0..D_MODEL-1
_COL_BFC  = D_MODEL    # fc1 bias scalar lives at [row _ROW_WFC, col D_MODEL]


# ------------------------------- Pallas kernel ------------------------------
def mrcan_kernel(y_prev_ref, p_ref, pred_ref):
    """Gridless single invocation; every tensor is far below one (8,128) vreg.

    y_prev : (B, W, 1)  raw module input, passed untouched (no wrapper ops)
    p      : (8, 128)   packed params (see _ROW_* layout above)
    pred   : (B, 1)     module output
    """
    yp = y_prev_ref[...]                                       # (B, W, 1)
    p  = p_ref[...]                                            # one lane-aligned load

    w2  = p[_ROW_W2:_ROW_W2 + 1, 0:D_MODEL]                    # (1, D)
    b2  = p[_ROW_B2:_ROW_B2 + 1, 0:D_MODEL]                    # (1, D)
    wfc = p[_ROW_WFC:_ROW_WFC + 1, 0:D_MODEL]                  # (1, D)
    bfc = p[_ROW_WFC:_ROW_WFC + 1, _COL_BFC:_COL_BFC + 1]      # (1, 1)

    # dec_output[:, -1, :] = linear2(y_prev)[:, -1, :]   (identity layer stacks,
    # so the full (B, W, d_model) dec tensor is never materialised and the
    # last-row slice is done here instead of in the wrapper).
    y_last = yp[:, WINDOW - 1, :]                              # (B, 1)
    last = y_last * w2 + b2                                    # (B, D)

    # output = fc1(last)
    pred_ref[...] = jnp.sum(last * wfc, axis=1, keepdims=True) + bfc


def _vmem():
    return pl.BlockSpec(memory_space=pltpu.MemorySpace.VMEM)


def mrcan_pallas(y_prev, p_packed):
    # Gridless single invocation: total footprint is a few hundred bytes, so any
    # tiling / pipelining would be pure overhead (review item: keep as-is).
    # TODO(synk): if batch grows on dual-TensorCore v7x, add a leading grid axis
    # over batch tiles with dimension_semantics=("parallel",) to use both cores.
    return pl.pallas_call(
        mrcan_kernel,
        out_shape=jax.ShapeDtypeStruct((B, 1), jnp.float32),
        in_specs=[_vmem(), _vmem()],
        out_specs=_vmem(),
    )(y_prev, p_packed)


# ------------------------------ JAX glue / model ----------------------------
def mrcan_forward(x, y_prev, p_packed):
    """x: (B, window, n_multiv), y_prev: (B, window, 1) -> (output (B,1), None).

    With identity encoder/decoder layer stacks (TODO at top), `x` only feeds the
    dead enc_input path, so it never reaches pred; the jit graph is exactly one
    Pallas custom call with no surrounding XLA fusions.
    """
    del x  # dead under identity layer stacks; restore when real layers land
    pred = mrcan_pallas(y_prev, p_packed)
    return pred, None


def init_params(key):
    ks = jax.random.split(key, 4)
    scale = 0.1
    # TODO(synk): conv2 weight/bias (Conv2d(1, d_model, (4,1))) belong here too
    # once the real DecoderLayer stack makes enc_input live.
    return {
        # Linear(1, d_model): torch weight (d_model, 1) -> stored as (1, d_model)
        "w2":  scale * jax.random.normal(ks[0], (1, D_MODEL), jnp.float32),
        "b2":  scale * jax.random.normal(ks[1], (1, D_MODEL), jnp.float32),
        # Linear(d_model, 1): torch weight (1, d_model)
        "wfc": scale * jax.random.normal(ks[2], (1, D_MODEL), jnp.float32),
        "bfc": scale * jax.random.normal(ks[3], (1, 1), jnp.float32),
    }


def pack_params(params):
    """Coalesce the parameter tensors into one (8,128)-aligned f32 array.

    Done once at init time, so the kernel sees a single lane-aligned input DMA
    instead of several padded sub-(8,128) transfers.
    """
    p = jnp.zeros((8, 128), jnp.float32)
    p = p.at[_ROW_W2:_ROW_W2 + 1, :D_MODEL].set(params["w2"])
    p = p.at[_ROW_B2:_ROW_B2 + 1, :D_MODEL].set(params["b2"])
    p = p.at[_ROW_WFC:_ROW_WFC + 1, :D_MODEL].set(params["wfc"])
    p = p.at[_ROW_WFC:_ROW_WFC + 1, _COL_BFC:_COL_BFC + 1].set(params["bfc"])
    return p


def mrcan_reference(x, y_prev, params):
    """Pure-JAX reference of the same eval-mode forward (identity layer stacks).

    With identity stacks the enc_input (conv/ReLU/max-pool of the concatenated
    x1 buffer) cannot influence pred, so only the linear2 -> last-row -> fc1
    chain is live.
    """
    del x
    dec = y_prev * params["w2"][None] + params["b2"][None]     # (B, W, D)
    last = dec[:, -1, :]                                       # (B, D)
    return jnp.sum(last * params["wfc"], axis=1, keepdims=True) + params["bfc"]


# ----------------------------------- main ------------------------------------
if __name__ == "__main__":
    key = jax.random.PRNGKey(0)
    kx, ky, kp = jax.random.split(key, 3)
    x = jax.random.normal(kx, (B, WINDOW, N_MULTIV), jnp.float32)
    y_prev = jax.random.normal(ky, (B, WINDOW, 1), jnp.float32)
    params = init_params(kp)
    p_packed = pack_params(params)          # packed once, reused every call

    fwd = jax.jit(mrcan_forward)
    pred, _ = fwd(x, y_prev, p_packed)
    pred = jax.block_until_ready(pred)

    ref = mrcan_reference(x, y_prev, params)
    assert pred.shape == (B, 1)
    assert jnp.allclose(pred, ref, atol=1e-5, rtol=1e-5), (pred, ref)

    print("KERNEL_OK")
</pallas_src>

<mosaic_0001>
module attributes {stable_mosaic.version = 11 : i64} {
  func.func @mrcan_kernel(%arg0: memref<2x8x1xf32, #tpu.memory_space<vmem>>, %arg1: memref<8x128xf32, #tpu.memory_space<vmem>>, %arg2: memref<2x1xf32, #tpu.memory_space<vmem>>) attributes {dimension_semantics = [], scalar_prefetch = 0 : i64, scratch_operands = 0 : i64, tpu.core_type = #tpu.core_type<tc>} {
    %c0 = arith.constant 0 : index
    %c0_0 = arith.constant 0 : index
    %c0_1 = arith.constant 0 : index
    %0 = vector.load %arg0[%c0, %c0_0, %c0_1] : memref<2x8x1xf32, #tpu.memory_space<vmem>>, vector<2x8x1xf32>
    %c0_2 = arith.constant 0 : index
    %c0_3 = arith.constant 0 : index
    %1 = vector.load %arg1[%c0_2, %c0_3] : memref<8x128xf32, #tpu.memory_space<vmem>>, vector<8x128xf32>
    %2 = vector.extract_strided_slice %1 {offsets = [0, 0], sizes = [1, 32], strides = [1, 1]} : vector<8x128xf32> to vector<1x32xf32>
    %3 = vector.extract_strided_slice %1 {offsets = [1, 0], sizes = [1, 32], strides = [1, 1]} : vector<8x128xf32> to vector<1x32xf32>
    %4 = vector.extract_strided_slice %1 {offsets = [2, 0], sizes = [1, 32], strides = [1, 1]} : vector<8x128xf32> to vector<1x32xf32>
    %5 = vector.extract_strided_slice %1 {offsets = [2, 32], sizes = [1, 1], strides = [1, 1]} : vector<8x128xf32> to vector<1x1xf32>
    %6 = vector.extract_strided_slice %0 {offsets = [0, 7, 0], sizes = [2, 1, 1], strides = [1, 1, 1]} : vector<2x8x1xf32> to vector<2x1x1xf32>
    %7 = vector.shape_cast %6 : vector<2x1x1xf32> to vector<2x1xf32>
    %8 = vector.broadcast %7 : vector<2x1xf32> to vector<2x32xf32>
    %9 = vector.broadcast %2 : vector<1x32xf32> to vector<2x32xf32>
    %10 = arith.mulf %8, %9 : vector<2x32xf32>
    %11 = vector.broadcast %3 : vector<1x32xf32> to vector<2x32xf32>
    %12 = arith.addf %10, %11 : vector<2x32xf32>
    %13 = vector.broadcast %4 : vector<1x32xf32> to vector<2x32xf32>
    %14 = arith.mulf %12, %13 : vector<2x32xf32>
    %cst = arith.constant dense<0.000000e+00> : vector<2xf32>
    %15 = vector.multi_reduction <add>, %14, %cst [1] : vector<2x32xf32> to vector<2xf32>
    %16 = vector.shape_cast %15 : vector<2xf32> to vector<2x1xf32>
    %17 = vector.broadcast %5 : vector<1x1xf32> to vector<2x1xf32>
    %18 = arith.addf %16, %17 : vector<2x1xf32>
    %c0_4 = arith.constant 0 : index
    %c0_5 = arith.constant 0 : index
    %19 = vector.load %arg2[%c0_4, %c0_5] : memref<2x1xf32, #tpu.memory_space<vmem>>, vector<2x1xf32>
    tpu.vector_store %arg2[%c0_4, %c0_5], %18 {strides = array<i32>} : memref<2x1xf32, #tpu.memory_space<vmem>>, vector<2x1xf32>,
    return
  }
}

</mosaic_0001>

<llo_original>
// kernel: mrcan_forward.1
$region0: #{mrcan_forward.1}
  #allocation0 [shape = 'u32[]', space=smem, size = 0x4, offset = 0x4, fixed_abs, tag = 'smem constant byte address 0x4 - core index']
  #allocation1 [shape = 'u32[72,128]{1,0:T(1,128)}', space=vmem, size = 0x9000, scoped, tag = 'internal scratch']
  %s0 = inlined_call_operand.vmem [shape: f32[2,8,1], index: 0, kind: input, shape index: {}]
  %s1 = inlined_call_operand.vmem [shape: f32[8,128], index: 1, kind: input, shape index: {}]
  %s2 = inlined_call_operand.vmem [shape: f32[2,1], index: 2, kind: output, shape index: {}]
  %s3 = sld [smem:[#allocation0]]
  $region18: #{mrcan_forward.1} parent=0
    _
  %s5 = ssub.s32 1, %s3
  %s6 = scalar_select 0, %s5, %s3
  // Predicated region
  $region2: #{mrcan_forward.1} parent=0 // pred_check
    _
  $region3: #{mrcan_forward.1} parent=0 // pred_check_branch
    %8 = sbr.rel (0) target = $region5
  $region4: #{mrcan_forward.1} parent=0 // pred_region
    _
  $region5: #{mrcan_forward.1} parent=0 // pred_fallthru
    _
  // Predicated region
  $region6: #{mrcan_forward.1} parent=0 // pred_check
    _
  $region7: #{mrcan_forward.1} parent=0 // pred_check_branch
    %10 = sbr.rel (0) target = $region9
  $region8: #{mrcan_forward.1} parent=0 // pred_region
    _
  $region9: #{mrcan_forward.1} parent=0 // pred_fallthru
    _
  %v11 = vld [vmem:[%s0] sm:$0xff]
  %v12 = vld [vmem:[%s0 + $0x8] sm:$0xff]
  %v13 = vld [vmem:[%s1] sm:$0xff]
  %15 = vset.pattern.permute.xlu0 0
  %16 = vperm.xlu0 %15, %v11
  %v17 = vpop.permute.xlu0 %16
  %20 = vset.pattern.permute.xlu0 0
  %21 = vperm.xlu0 %20, %v12
  %v22 = vpop.permute.xlu0 %21
  %v24 = vperm.slane %v13, 0
  %v25 = vmul.f32 %v17, %v24
  %v26 = vmul.f32 %v22, %v24
  %v27 = vperm.slane %v13, 1
  %v28 = vadd.f32 %v25, %v27
  %v29 = vadd.f32 %v26, %v27
  %v30 = vperm.slane %v13, 2
  %v31 = vmul.f32 %v28, %v30
  %v32 = vmul.f32 %v29, %v30
  %v35 = vrot.slane %v32, 7
  %vm38 = vcmask 261127
  %v39 = vsel %vm38, %v31, 0.0
  %40 = vadd.xlane.f32.xlu0 %v39
  %v41 = vpop.xlane.xlu0 %40
  %vm42 = vcmask 253952
  %v43 = vsel %vm42, %v35, 0.0
  %44 = vadd.xlane.f32.xlu0 %v43
  %v45 = vpop.xlane.xlu0 %44
  %v46 = vadd.f32 %v41, %v30
  %v47 = vadd.f32 %v45, %v30
  %50 = vrot.lane.b32.xlu0 %v46, 96
  %v51 = vpop.permute.xlu0 %50
  %52 = vrot.lane.b32.xlu0 %v47, 96
  %v53 = vpop.permute.xlu0 %52
  %vm56 = vcmask 7175
  %57 = vst.msk [vmem:[%s2 - $0x7] sm:$0x80] %vm56, %v51
  %vm58 = vcmask 0
  %59 = vst.msk [vmem:[%s2 + $0x1] sm:$0x1] %vm58, %v53
  // Predicated region
  $region10: #{mrcan_forward.1} parent=0 // pred_check
    _
  $region11: #{mrcan_forward.1} parent=0 // pred_check_branch
    %61 = sbr.rel (0) target = $region13
  $region12: #{mrcan_forward.1} parent=0 // pred_region
    _
  $region13: #{mrcan_forward.1} parent=0 // pred_fallthru
    _
  // Predicated region
  $region14: #{mrcan_forward.1} parent=0 // pred_check
    _
  $region15: #{mrcan_forward.1} parent=0 // pred_check_branch
    %63 = sbr.rel (0) target = $region17
  $region16: #{mrcan_forward.1} parent=0 // pred_region
    _
  $region17: #{mrcan_forward.1} parent=0 // pred_fallthru
    _

</llo_original>
